<compile_context>
chip_gen: v5e
topology: v5e:2x2
jax: 0.10.0
libtpu: 0.0.40
codegen_flags: <defaults>
</compile_context>

<pallas_src>
import jax
import jax.numpy as jnp
from jax.experimental import pallas as pl
from jax.experimental.pallas import tpu as pltpu

# ---------------- model hyper-params (small, consistent with the module) -------------
VOCAB = 50            # input_size == output_size == len(english.vocab) (small stand-in)
EMBED_SIZE = 32
HIDDEN_SIZE = 32
NUM_LAYERS = 2
DROPOUT_P = 0.1       # TODO(synk): nn.Dropout is identity at inference; stochastic
                      # training-mode masking is not implemented.
SEQ_LEN = 8
BATCH = 2


# --------------------------- fused decoder Pallas kernel -----------------------------
def _make_decoder_kernel(num_layers, hidden_size):
    H = hidden_size

    def decoder_kernel(enc_ref, h_ref, emb_ref, we_ref, be_ref, *rest):
        # inputs: per-layer (w_ih, w_hh, b) then fc_w, fc_b; outputs: pred, hidden, cell
        lstm_refs = rest[:3 * num_layers]
        fcw_ref = rest[3 * num_layers]
        fcb_ref = rest[3 * num_layers + 1]
        pred_ref = rest[3 * num_layers + 2]
        hid_ref = rest[3 * num_layers + 3]
        cell_ref = rest[3 * num_layers + 4]

        T = enc_ref.shape[0]
        enc = enc_ref[...]                                 # (T, B, 2H)
        h0 = h_ref[...]                                    # (B, H)  attention query
        B = h0.shape[0]

        # ---- additive attention --------------------------------------------------
        # energy = relu(cat([h_rep, enc], -1) @ We^T + be); We is split across the
        # concat boundary (mathematically identical, avoids building the (T,B,3H) cat).
        we = we_ref[...]                                   # (1, 3H)  PyTorch (out,in) layout
        be = be_ref[...]                                   # (1, 1)
        we_h = we[:, :H]                                   # (1, H)
        we_e = we[:, H:]                                   # (1, 2H)
        s_h = jnp.sum(h0 * we_h, axis=-1, keepdims=True)   # (B, 1)

        # per-timestep energies on 2-D (B, .) slices; T is small & static -> unrolled
        e_list = []
        for t in range(T):
            s_e_t = jnp.sum(enc[t] * we_e, axis=-1, keepdims=True)      # (B, 1)
            e_list.append(jnp.maximum(s_e_t + s_h + be, 0.0))           # ReLU

        # softmax over the sequence axis (dim=0), numerically stabilized
        m = e_list[0]
        for t in range(1, T):
            m = jnp.maximum(m, e_list[t])
        p_list = [jnp.exp(e - m) for e in e_list]
        denom = p_list[0]
        for t in range(1, T):
            denom = denom + p_list[t]

        # context[b,:] = sum_t softmax_t[b] * enc[t,b,:]  == bmm((B,1,T),(B,T,2H))
        ctx = p_list[0] * enc[0]
        for t in range(1, T):
            ctx = ctx + p_list[t] * enc[t]
        context = ctx * (1.0 / denom)                      # (B, 2H)

        # ---- rnn input -----------------------------------------------------------
        x = jnp.concatenate([context, emb_ref[...]], axis=-1)   # (B, 2H + E)

        # ---- num_layers x single-step LSTM ----------------------------------------
        # h_prev = c_prev = 0: the spec calls self.rnn(rnn_input) with no initial
        # state (PyTorch default zeros).  Kept in the general form so a nonzero
        # initial state would be a one-line change.
        zeros = jnp.zeros((B, H), jnp.float32)
        for layer in range(num_layers):
            w_ih = lstm_refs[3 * layer][...]               # (D_in, 4H)
            w_hh = lstm_refs[3 * layer + 1][...]           # (H, 4H)
            b = lstm_refs[3 * layer + 2][...]              # (1, 4H)  (= b_ih + b_hh)
            h_prev, c_prev = zeros, zeros
            gates = (jnp.dot(x, w_ih, preferred_element_type=jnp.float32)
                     + jnp.dot(h_prev, w_hh, preferred_element_type=jnp.float32)
                     + b)                                  # (B, 4H), PyTorch gate order i,f,g,o
            # one full-width sigmoid over the 4H = 128-lane vreg; tanh only on g slice
            sig = jax.nn.sigmoid(gates)
            i_g = sig[:, 0:H]
            f_g = sig[:, H:2 * H]
            o_g = sig[:, 3 * H:4 * H]
            g_g = jnp.tanh(gates[:, 2 * H:3 * H])
            c_new = f_g * c_prev + i_g * g_g
            h_new = o_g * jnp.tanh(c_new)
            hid_ref[layer] = h_new                         # h_n layout: (num_layers, B, H)
            cell_ref[layer] = c_new
            x = h_new                                      # feeds the next layer

        # ---- output projection (fc fused into the same kernel) --------------------
        pred_ref[...] = (jnp.dot(x, fcw_ref[...], preferred_element_type=jnp.float32)
                         + fcb_ref[...])

    return decoder_kernel


def decoder_forward(x_tok, encoder_states, hidden, cell, params):
    """x_tok: (B,) int32; encoder_states: (T,B,2H); hidden/cell: (1,B,H)."""
    del cell  # spec's forward never consumes the incoming cell (rnn called w/o state)
    T, B, _ = encoder_states.shape
    H, L = HIDDEN_SIZE, NUM_LAYERS
    V = params["fc_w"].shape[1]

    # embedding + dropout (identity in eval mode); data-dependent row gather left to XLA
    emb = jnp.take(params["embedding"], x_tok, axis=0)           # (B, E)
    h0 = hidden[0]                                               # (B, H)

    inputs = [encoder_states, h0, emb, params["energy_w"], params["energy_b"]]
    for layer in range(L):
        p = params["lstm"][layer]
        inputs += [p["w_ih"], p["w_hh"], p["b"]]
    inputs += [params["fc_w"], params["fc_b"]]

    vmem = pl.BlockSpec(memory_space=pltpu.MemorySpace.VMEM)
    pred, hid, cel = pl.pallas_call(
        _make_decoder_kernel(L, H),
        out_shape=(jax.ShapeDtypeStruct((B, V), jnp.float32),
                   jax.ShapeDtypeStruct((L, B, H), jnp.float32),
                   jax.ShapeDtypeStruct((L, B, H), jnp.float32)),
        in_specs=[vmem] * len(inputs),
        out_specs=(vmem, vmem, vmem),
    )(*inputs)
    return pred, hid, cel


# ------------------------------ parameter construction -------------------------------
def init_params(key):
    H, E, V, L = HIDDEN_SIZE, EMBED_SIZE, VOCAB, NUM_LAYERS
    k = 1.0 / jnp.sqrt(jnp.float32(H))
    keys = iter(jax.random.split(key, 64))
    u = lambda shape: jax.random.uniform(next(keys), shape, jnp.float32, -k, k)

    params = {
        "embedding": jax.random.normal(next(keys), (V, E), jnp.float32),
        "energy_w": u((1, 3 * H)),      # nn.Linear(3H, 1).weight in PyTorch (out, in) layout
        "energy_b": u((1, 1)),
        "fc_w": u((H, V)),              # transposed PyTorch (V, H)
        "fc_b": u((1, V)),
    }
    lstm = []
    for layer in range(L):
        d_in = 2 * H + E if layer == 0 else H
        lstm.append({
            "w_ih": u((d_in, 4 * H)),                # transposed PyTorch (4H, d_in)
            "w_hh": u((H, 4 * H)),                   # transposed PyTorch (4H, H)
            "b": u((1, 4 * H)) + u((1, 4 * H)),      # b_ih + b_hh
        })
    params["lstm"] = lstm
    return params


# ------------------------------- pure-JAX reference ----------------------------------
def decoder_forward_ref(x_tok, encoder_states, hidden, cell, params):
    T, B, _ = encoder_states.shape
    H = HIDDEN_SIZE
    emb = jnp.take(params["embedding"], x_tok, axis=0)[None]          # (1, B, E)
    h_rep = jnp.broadcast_to(hidden, (T,) + hidden.shape[1:])         # hidden.repeat(T,1,1)
    cat = jnp.concatenate([h_rep, encoder_states], axis=2)            # (T, B, 3H)
    energy = jax.nn.relu(cat @ params["energy_w"].T + params["energy_b"])   # (T, B, 1)
    attention = jax.nn.softmax(energy, axis=0)                        # softmax over seq dim
    attention_p = jnp.transpose(attention, (1, 2, 0))                 # (B, 1, T)
    enc_p = jnp.transpose(encoder_states, (1, 0, 2))                  # (B, T, 2H)
    context = jnp.einsum("bot,btk->bok", attention_p, enc_p)          # (B, 1, 2H)
    context = jnp.transpose(context, (1, 0, 2))                       # (1, B, 2H)
    rnn_input = jnp.concatenate([context, emb], axis=2)               # (1, B, 2H+E)

    x = rnn_input[0]
    hs, cs = [], []
    for layer in range(NUM_LAYERS):
        p = params["lstm"][layer]
        h_prev = jnp.zeros((B, H), jnp.float32)                       # rnn called w/o state
        c_prev = jnp.zeros((B, H), jnp.float32)
        gates = x @ p["w_ih"] + h_prev @ p["w_hh"] + p["b"]
        i, f, g, o = jnp.split(gates, 4, axis=-1)
        c = jax.nn.sigmoid(f) * c_prev + jax.nn.sigmoid(i) * jnp.tanh(g)
        h = jax.nn.sigmoid(o) * jnp.tanh(c)
        hs.append(h)
        cs.append(c)
        x = h

    prediction = (x[None] @ params["fc_w"] + params["fc_b"])[0]       # fc(outputs).squeeze(0)
    return prediction, jnp.stack(hs), jnp.stack(cs)


# --------------------------------------- main ----------------------------------------
if __name__ == "__main__":
    key = jax.random.PRNGKey(0)
    k_params, k_tok, k_enc, k_h, k_c = jax.random.split(key, 5)

    params = init_params(k_params)
    x_tok = jax.random.randint(k_tok, (BATCH,), 0, VOCAB, dtype=jnp.int32)
    encoder_states = jax.random.normal(k_enc, (SEQ_LEN, BATCH, 2 * HIDDEN_SIZE), jnp.float32)
    hidden = jax.random.normal(k_h, (1, BATCH, HIDDEN_SIZE), jnp.float32)
    cell = jax.random.normal(k_c, (1, BATCH, HIDDEN_SIZE), jnp.float32)

    fwd = jax.jit(decoder_forward)
    pred, hid_out, cell_out = fwd(x_tok, encoder_states, hidden, cell, params)
    jax.block_until_ready((pred, hid_out, cell_out))

    # correctness check vs. pure-JAX reference
    ref_pred, ref_hid, ref_cell = decoder_forward_ref(x_tok, encoder_states, hidden, cell, params)
    assert pred.shape == (BATCH, VOCAB)
    assert hid_out.shape == (NUM_LAYERS, BATCH, HIDDEN_SIZE)
    assert cell_out.shape == (NUM_LAYERS, BATCH, HIDDEN_SIZE)
    assert jnp.allclose(pred, ref_pred, rtol=1e-4, atol=1e-4)
    assert jnp.allclose(hid_out, ref_hid, rtol=1e-4, atol=1e-4)
    assert jnp.allclose(cell_out, ref_cell, rtol=1e-4, atol=1e-4)

    print("KERNEL_OK")
</pallas_src>

<mosaic_0001>
module attributes {stable_mosaic.version = 11 : i64} {
  func.func @decoder_kernel(%arg0: memref<8x2x64xf32, #tpu.memory_space<vmem>>, %arg1: memref<2x32xf32, #tpu.memory_space<vmem>>, %arg2: memref<2x32xf32, #tpu.memory_space<vmem>>, %arg3: memref<1x96xf32, #tpu.memory_space<vmem>>, %arg4: memref<1x1xf32, #tpu.memory_space<vmem>>, %arg5: memref<96x128xf32, #tpu.memory_space<vmem>>, %arg6: memref<32x128xf32, #tpu.memory_space<vmem>>, %arg7: memref<1x128xf32, #tpu.memory_space<vmem>>, %arg8: memref<32x128xf32, #tpu.memory_space<vmem>>, %arg9: memref<32x128xf32, #tpu.memory_space<vmem>>, %arg10: memref<1x128xf32, #tpu.memory_space<vmem>>, %arg11: memref<32x50xf32, #tpu.memory_space<vmem>>, %arg12: memref<1x50xf32, #tpu.memory_space<vmem>>, %arg13: memref<2x50xf32, #tpu.memory_space<vmem>>, %arg14: memref<2x2x32xf32, #tpu.memory_space<vmem>>, %arg15: memref<2x2x32xf32, #tpu.memory_space<vmem>>) attributes {dimension_semantics = [], scalar_prefetch = 0 : i64, scratch_operands = 0 : i64, tpu.core_type = #tpu.core_type<tc>} {
    %c0 = arith.constant 0 : index
    %c0_0 = arith.constant 0 : index
    %c0_1 = arith.constant 0 : index
    %0 = vector.load %arg0[%c0, %c0_0, %c0_1] : memref<8x2x64xf32, #tpu.memory_space<vmem>>, vector<8x2x64xf32>
    %c0_2 = arith.constant 0 : index
    %c0_3 = arith.constant 0 : index
    %1 = vector.load %arg1[%c0_2, %c0_3] : memref<2x32xf32, #tpu.memory_space<vmem>>, vector<2x32xf32>
    %c0_4 = arith.constant 0 : index
    %c0_5 = arith.constant 0 : index
    %2 = vector.load %arg3[%c0_4, %c0_5] : memref<1x96xf32, #tpu.memory_space<vmem>>, vector<1x96xf32>
    %c0_6 = arith.constant 0 : index
    %c0_7 = arith.constant 0 : index
    %3 = vector.load %arg4[%c0_6, %c0_7] : memref<1x1xf32, #tpu.memory_space<vmem>>, vector<1x1xf32>
    %4 = vector.extract_strided_slice %2 {offsets = [0, 0], sizes = [1, 32], strides = [1, 1]} : vector<1x96xf32> to vector<1x32xf32>
    %5 = vector.extract_strided_slice %2 {offsets = [0, 32], sizes = [1, 64], strides = [1, 1]} : vector<1x96xf32> to vector<1x64xf32>
    %6 = vector.broadcast %4 : vector<1x32xf32> to vector<2x32xf32>
    %7 = arith.mulf %1, %6 : vector<2x32xf32>
    %cst = arith.constant dense<0.000000e+00> : vector<2xf32>
    %8 = vector.multi_reduction <add>, %7, %cst [1] : vector<2x32xf32> to vector<2xf32>
    %9 = vector.shape_cast %8 : vector<2xf32> to vector<2x1xf32>
    %10 = vector.extract_strided_slice %0 {offsets = [0, 0, 0], sizes = [1, 2, 64], strides = [1, 1, 1]} : vector<8x2x64xf32> to vector<1x2x64xf32>
    %11 = vector.shape_cast %10 : vector<1x2x64xf32> to vector<2x64xf32>
    %12 = vector.broadcast %5 : vector<1x64xf32> to vector<2x64xf32>
    %13 = arith.mulf %11, %12 : vector<2x64xf32>
    %cst_8 = arith.constant dense<0.000000e+00> : vector<2xf32>
    %14 = vector.multi_reduction <add>, %13, %cst_8 [1] : vector<2x64xf32> to vector<2xf32>
    %15 = vector.shape_cast %14 : vector<2xf32> to vector<2x1xf32>
    %16 = arith.addf %15, %9 : vector<2x1xf32>
    %17 = vector.broadcast %3 : vector<1x1xf32> to vector<2x1xf32>
    %18 = arith.addf %16, %17 : vector<2x1xf32>
    %cst_9 = arith.constant 0.000000e+00 : f32
    %19 = vector.broadcast %cst_9 : f32 to vector<2x1xf32>
    %20 = arith.maximumf %18, %19 : vector<2x1xf32>
    %21 = vector.extract_strided_slice %0 {offsets = [1, 0, 0], sizes = [1, 2, 64], strides = [1, 1, 1]} : vector<8x2x64xf32> to vector<1x2x64xf32>
    %22 = vector.shape_cast %21 : vector<1x2x64xf32> to vector<2x64xf32>
    %23 = vector.broadcast %5 : vector<1x64xf32> to vector<2x64xf32>
    %24 = arith.mulf %22, %23 : vector<2x64xf32>
    %cst_10 = arith.constant dense<0.000000e+00> : vector<2xf32>
    %25 = vector.multi_reduction <add>, %24, %cst_10 [1] : vector<2x64xf32> to vector<2xf32>
    %26 = vector.shape_cast %25 : vector<2xf32> to vector<2x1xf32>
    %27 = arith.addf %26, %9 : vector<2x1xf32>
    %28 = vector.broadcast %3 : vector<1x1xf32> to vector<2x1xf32>
    %29 = arith.addf %27, %28 : vector<2x1xf32>
    %cst_11 = arith.constant 0.000000e+00 : f32
    %30 = vector.broadcast %cst_11 : f32 to vector<2x1xf32>
    %31 = arith.maximumf %29, %30 : vector<2x1xf32>
    %32 = vector.extract_strided_slice %0 {offsets = [2, 0, 0], sizes = [1, 2, 64], strides = [1, 1, 1]} : vector<8x2x64xf32> to vector<1x2x64xf32>
    %33 = vector.shape_cast %32 : vector<1x2x64xf32> to vector<2x64xf32>
    %34 = vector.broadcast %5 : vector<1x64xf32> to vector<2x64xf32>
    %35 = arith.mulf %33, %34 : vector<2x64xf32>
    %cst_12 = arith.constant dense<0.000000e+00> : vector<2xf32>
    %36 = vector.multi_reduction <add>, %35, %cst_12 [1] : vector<2x64xf32> to vector<2xf32>
    %37 = vector.shape_cast %36 : vector<2xf32> to vector<2x1xf32>
    %38 = arith.addf %37, %9 : vector<2x1xf32>
    %39 = vector.broadcast %3 : vector<1x1xf32> to vector<2x1xf32>
    %40 = arith.addf %38, %39 : vector<2x1xf32>
    %cst_13 = arith.constant 0.000000e+00 : f32
    %41 = vector.broadcast %cst_13 : f32 to vector<2x1xf32>
    %42 = arith.maximumf %40, %41 : vector<2x1xf32>
    %43 = vector.extract_strided_slice %0 {offsets = [3, 0, 0], sizes = [1, 2, 64], strides = [1, 1, 1]} : vector<8x2x64xf32> to vector<1x2x64xf32>
    %44 = vector.shape_cast %43 : vector<1x2x64xf32> to vector<2x64xf32>
    %45 = vector.broadcast %5 : vector<1x64xf32> to vector<2x64xf32>
    %46 = arith.mulf %44, %45 : vector<2x64xf32>
    %cst_14 = arith.constant dense<0.000000e+00> : vector<2xf32>
    %47 = vector.multi_reduction <add>, %46, %cst_14 [1] : vector<2x64xf32> to vector<2xf32>
    %48 = vector.shape_cast %47 : vector<2xf32> to vector<2x1xf32>
    %49 = arith.addf %48, %9 : vector<2x1xf32>
    %50 = vector.broadcast %3 : vector<1x1xf32> to vector<2x1xf32>
    %51 = arith.addf %49, %50 : vector<2x1xf32>
    %cst_15 = arith.constant 0.000000e+00 : f32
    %52 = vector.broadcast %cst_15 : f32 to vector<2x1xf32>
    %53 = arith.maximumf %51, %52 : vector<2x1xf32>
    %54 = vector.extract_strided_slice %0 {offsets = [4, 0, 0], sizes = [1, 2, 64], strides = [1, 1, 1]} : vector<8x2x64xf32> to vector<1x2x64xf32>
    %55 = vector.shape_cast %54 : vector<1x2x64xf32> to vector<2x64xf32>
    %56 = vector.broadcast %5 : vector<1x64xf32> to vector<2x64xf32>
    %57 = arith.mulf %55, %56 : vector<2x64xf32>
    %cst_16 = arith.constant dense<0.000000e+00> : vector<2xf32>
    %58 = vector.multi_reduction <add>, %57, %cst_16 [1] : vector<2x64xf32> to vector<2xf32>
    %59 = vector.shape_cast %58 : vector<2xf32> to vector<2x1xf32>
    %60 = arith.addf %59, %9 : vector<2x1xf32>
    %61 = vector.broadcast %3 : vector<1x1xf32> to vector<2x1xf32>
    %62 = arith.addf %60, %61 : vector<2x1xf32>
    %cst_17 = arith.constant 0.000000e+00 : f32
    %63 = vector.broadcast %cst_17 : f32 to vector<2x1xf32>
    %64 = arith.maximumf %62, %63 : vector<2x1xf32>
    %65 = vector.extract_strided_slice %0 {offsets = [5, 0, 0], sizes = [1, 2, 64], strides = [1, 1, 1]} : vector<8x2x64xf32> to vector<1x2x64xf32>
    %66 = vector.shape_cast %65 : vector<1x2x64xf32> to vector<2x64xf32>
    %67 = vector.broadcast %5 : vector<1x64xf32> to vector<2x64xf32>
    %68 = arith.mulf %66, %67 : vector<2x64xf32>
    %cst_18 = arith.constant dense<0.000000e+00> : vector<2xf32>
    %69 = vector.multi_reduction <add>, %68, %cst_18 [1] : vector<2x64xf32> to vector<2xf32>
    %70 = vector.shape_cast %69 : vector<2xf32> to vector<2x1xf32>
    %71 = arith.addf %70, %9 : vector<2x1xf32>
    %72 = vector.broadcast %3 : vector<1x1xf32> to vector<2x1xf32>
    %73 = arith.addf %71, %72 : vector<2x1xf32>
    %cst_19 = arith.constant 0.000000e+00 : f32
    %74 = vector.broadcast %cst_19 : f32 to vector<2x1xf32>
    %75 = arith.maximumf %73, %74 : vector<2x1xf32>
    %76 = vector.extract_strided_slice %0 {offsets = [6, 0, 0], sizes = [1, 2, 64], strides = [1, 1, 1]} : vector<8x2x64xf32> to vector<1x2x64xf32>
    %77 = vector.shape_cast %76 : vector<1x2x64xf32> to vector<2x64xf32>
    %78 = vector.broadcast %5 : vector<1x64xf32> to vector<2x64xf32>
    %79 = arith.mulf %77, %78 : vector<2x64xf32>
    %cst_20 = arith.constant dense<0.000000e+00> : vector<2xf32>
    %80 = vector.multi_reduction <add>, %79, %cst_20 [1] : vector<2x64xf32> to vector<2xf32>
    %81 = vector.shape_cast %80 : vector<2xf32> to vector<2x1xf32>
    %82 = arith.addf %81, %9 : vector<2x1xf32>
    %83 = vector.broadcast %3 : vector<1x1xf32> to vector<2x1xf32>
    %84 = arith.addf %82, %83 : vector<2x1xf32>
    %cst_21 = arith.constant 0.000000e+00 : f32
    %85 = vector.broadcast %cst_21 : f32 to vector<2x1xf32>
    %86 = arith.maximumf %84, %85 : vector<2x1xf32>
    %87 = vector.extract_strided_slice %0 {offsets = [7, 0, 0], sizes = [1, 2, 64], strides = [1, 1, 1]} : vector<8x2x64xf32> to vector<1x2x64xf32>
    %88 = vector.shape_cast %87 : vector<1x2x64xf32> to vector<2x64xf32>
    %89 = vector.broadcast %5 : vector<1x64xf32> to vector<2x64xf32>
    %90 = arith.mulf %88, %89 : vector<2x64xf32>
    %cst_22 = arith.constant dense<0.000000e+00> : vector<2xf32>
    %91 = vector.multi_reduction <add>, %90, %cst_22 [1] : vector<2x64xf32> to vector<2xf32>
    %92 = vector.shape_cast %91 : vector<2xf32> to vector<2x1xf32>
    %93 = arith.addf %92, %9 : vector<2x1xf32>
    %94 = vector.broadcast %3 : vector<1x1xf32> to vector<2x1xf32>
    %95 = arith.addf %93, %94 : vector<2x1xf32>
    %cst_23 = arith.constant 0.000000e+00 : f32
    %96 = vector.broadcast %cst_23 : f32 to vector<2x1xf32>
    %97 = arith.maximumf %95, %96 : vector<2x1xf32>
    %98 = arith.maximumf %20, %31 : vector<2x1xf32>
    %99 = arith.maximumf %98, %42 : vector<2x1xf32>
    %100 = arith.maximumf %99, %53 : vector<2x1xf32>
    %101 = arith.maximumf %100, %64 : vector<2x1xf32>
    %102 = arith.maximumf %101, %75 : vector<2x1xf32>
    %103 = arith.maximumf %102, %86 : vector<2x1xf32>
    %104 = arith.maximumf %103, %97 : vector<2x1xf32>
    %105 = arith.subf %20, %104 : vector<2x1xf32>
    %106 = math.exp %105 : vector<2x1xf32>
    %107 = arith.subf %31, %104 : vector<2x1xf32>
    %108 = math.exp %107 : vector<2x1xf32>
    %109 = arith.subf %42, %104 : vector<2x1xf32>
    %110 = math.exp %109 : vector<2x1xf32>
    %111 = arith.subf %53, %104 : vector<2x1xf32>
    %112 = math.exp %111 : vector<2x1xf32>
    %113 = arith.subf %64, %104 : vector<2x1xf32>
    %114 = math.exp %113 : vector<2x1xf32>
    %115 = arith.subf %75, %104 : vector<2x1xf32>
    %116 = math.exp %115 : vector<2x1xf32>
    %117 = arith.subf %86, %104 : vector<2x1xf32>
    %118 = math.exp %117 : vector<2x1xf32>
    %119 = arith.subf %97, %104 : vector<2x1xf32>
    %120 = math.exp %119 : vector<2x1xf32>
    %121 = arith.addf %106, %108 : vector<2x1xf32>
    %122 = arith.addf %121, %110 : vector<2x1xf32>
    %123 = arith.addf %122, %112 : vector<2x1xf32>
    %124 = arith.addf %123, %114 : vector<2x1xf32>
    %125 = arith.addf %124, %116 : vector<2x1xf32>
    %126 = arith.addf %125, %118 : vector<2x1xf32>
    %127 = arith.addf %126, %120 : vector<2x1xf32>
    %128 = vector.extract_strided_slice %0 {offsets = [0, 0, 0], sizes = [1, 2, 64], strides = [1, 1, 1]} : vector<8x2x64xf32> to vector<1x2x64xf32>
    %129 = vector.shape_cast %128 : vector<1x2x64xf32> to vector<2x64xf32>
    %130 = vector.broadcast %106 : vector<2x1xf32> to vector<2x64xf32>
    %131 = arith.mulf %130, %129 : vector<2x64xf32>
    %132 = vector.extract_strided_slice %0 {offsets = [1, 0, 0], sizes = [1, 2, 64], strides = [1, 1, 1]} : vector<8x2x64xf32> to vector<1x2x64xf32>
    %133 = vector.shape_cast %132 : vector<1x2x64xf32> to vector<2x64xf32>
    %134 = vector.broadcast %108 : vector<2x1xf32> to vector<2x64xf32>
    %135 = arith.mulf %134, %133 : vector<2x64xf32>
    %136 = arith.addf %131, %135 : vector<2x64xf32>
    %137 = vector.extract_strided_slice %0 {offsets = [2, 0, 0], sizes = [1, 2, 64], strides = [1, 1, 1]} : vector<8x2x64xf32> to vector<1x2x64xf32>
    %138 = vector.shape_cast %137 : vector<1x2x64xf32> to vector<2x64xf32>
    %139 = vector.broadcast %110 : vector<2x1xf32> to vector<2x64xf32>
    %140 = arith.mulf %139, %138 : vector<2x64xf32>
    %141 = arith.addf %136, %140 : vector<2x64xf32>
    %142 = vector.extract_strided_slice %0 {offsets = [3, 0, 0], sizes = [1, 2, 64], strides = [1, 1, 1]} : vector<8x2x64xf32> to vector<1x2x64xf32>
    %143 = vector.shape_cast %142 : vector<1x2x64xf32> to vector<2x64xf32>
    %144 = vector.broadcast %112 : vector<2x1xf32> to vector<2x64xf32>
    %145 = arith.mulf %144, %143 : vector<2x64xf32>
    %146 = arith.addf %141, %145 : vector<2x64xf32>
    %147 = vector.extract_strided_slice %0 {offsets = [4, 0, 0], sizes = [1, 2, 64], strides = [1, 1, 1]} : vector<8x2x64xf32> to vector<1x2x64xf32>
    %148 = vector.shape_cast %147 : vector<1x2x64xf32> to vector<2x64xf32>
    %149 = vector.broadcast %114 : vector<2x1xf32> to vector<2x64xf32>
    %150 = arith.mulf %149, %148 : vector<2x64xf32>
    %151 = arith.addf %146, %150 : vector<2x64xf32>
    %152 = vector.extract_strided_slice %0 {offsets = [5, 0, 0], sizes = [1, 2, 64], strides = [1, 1, 1]} : vector<8x2x64xf32> to vector<1x2x64xf32>
    %153 = vector.shape_cast %152 : vector<1x2x64xf32> to vector<2x64xf32>
    %154 = vector.broadcast %116 : vector<2x1xf32> to vector<2x64xf32>
    %155 = arith.mulf %154, %153 : vector<2x64xf32>
    %156 = arith.addf %151, %155 : vector<2x64xf32>
    %157 = vector.extract_strided_slice %0 {offsets = [6, 0, 0], sizes = [1, 2, 64], strides = [1, 1, 1]} : vector<8x2x64xf32> to vector<1x2x64xf32>
    %158 = vector.shape_cast %157 : vector<1x2x64xf32> to vector<2x64xf32>
    %159 = vector.broadcast %118 : vector<2x1xf32> to vector<2x64xf32>
    %160 = arith.mulf %159, %158 : vector<2x64xf32>
    %161 = arith.addf %156, %160 : vector<2x64xf32>
    %162 = vector.extract_strided_slice %0 {offsets = [7, 0, 0], sizes = [1, 2, 64], strides = [1, 1, 1]} : vector<8x2x64xf32> to vector<1x2x64xf32>
    %163 = vector.shape_cast %162 : vector<1x2x64xf32> to vector<2x64xf32>
    %164 = vector.broadcast %120 : vector<2x1xf32> to vector<2x64xf32>
    %165 = arith.mulf %164, %163 : vector<2x64xf32>
    %166 = arith.addf %161, %165 : vector<2x64xf32>
    %cst_24 = arith.constant 1.000000e+00 : f32
    %167 = vector.broadcast %cst_24 : f32 to vector<2x1xf32>
    %168 = arith.divf %167, %127 : vector<2x1xf32>
    %169 = vector.broadcast %168 : vector<2x1xf32> to vector<2x64xf32>
    %170 = arith.mulf %166, %169 : vector<2x64xf32>
    %c0_25 = arith.constant 0 : index
    %c0_26 = arith.constant 0 : index
    %171 = vector.load %arg2[%c0_25, %c0_26] : memref<2x32xf32, #tpu.memory_space<vmem>>, vector<2x32xf32>
    %172 = tpu.concatenate %170, %171 in 1 : vector<2x64xf32>, vector<2x32xf32> -> vector<2x96xf32>
    %cst_27 = arith.constant 0.000000e+00 : f32
    %173 = vector.broadcast %cst_27 : f32 to vector<2x32xf32>
    %c0_28 = arith.constant 0 : index
    %c0_29 = arith.constant 0 : index
    %174 = vector.load %arg5[%c0_28, %c0_29] : memref<96x128xf32, #tpu.memory_space<vmem>>, vector<96x128xf32>
    %c0_30 = arith.constant 0 : index
    %c0_31 = arith.constant 0 : index
    %175 = vector.load %arg6[%c0_30, %c0_31] : memref<32x128xf32, #tpu.memory_space<vmem>>, vector<32x128xf32>
    %c0_32 = arith.constant 0 : index
    %c0_33 = arith.constant 0 : index
    %176 = vector.load %arg7[%c0_32, %c0_33] : memref<1x128xf32, #tpu.memory_space<vmem>>, vector<1x128xf32>
    %cst_34 = arith.constant dense<0.000000e+00> : vector<2x128xf32>
    %177 = tpu.matmul %172, %174, %cst_34 {dimension_numbers = #tpu.dot_dimension_numbers<[1], [0], [0], [1], [0, 0, 1, 1], [], []>} : vector<2x96xf32>, vector<96x128xf32>, vector<2x128xf32> -> vector<2x128xf32>
    %cst_35 = arith.constant dense<0.000000e+00> : vector<2x128xf32>
    %178 = tpu.matmul %173, %175, %cst_35 {dimension_numbers = #tpu.dot_dimension_numbers<[1], [0], [0], [1], [0, 0, 1, 1], [], []>} : vector<2x32xf32>, vector<32x128xf32>, vector<2x128xf32> -> vector<2x128xf32>
    %179 = arith.addf %177, %178 : vector<2x128xf32>
    %180 = vector.broadcast %176 : vector<1x128xf32> to vector<2x128xf32>
    %181 = arith.addf %179, %180 : vector<2x128xf32>
    %182 = arith.negf %181 : vector<2x128xf32>
    %183 = math.exp %182 : vector<2x128xf32>
    %cst_36 = arith.constant 1.000000e+00 : f32
    %184 = vector.broadcast %cst_36 : f32 to vector<2x128xf32>
    %185 = arith.addf %184, %183 : vector<2x128xf32>
    %186 = arith.divf %184, %185 : vector<2x128xf32>
    %187 = vector.extract_strided_slice %186 {offsets = [0, 0], sizes = [2, 32], strides = [1, 1]} : vector<2x128xf32> to vector<2x32xf32>
    %188 = vector.extract_strided_slice %186 {offsets = [0, 32], sizes = [2, 32], strides = [1, 1]} : vector<2x128xf32> to vector<2x32xf32>
    %189 = vector.extract_strided_slice %186 {offsets = [0, 96], sizes = [2, 32], strides = [1, 1]} : vector<2x128xf32> to vector<2x32xf32>
    %190 = vector.extract_strided_slice %181 {offsets = [0, 64], sizes = [2, 32], strides = [1, 1]} : vector<2x128xf32> to vector<2x32xf32>
    %191 = math.tanh %190 : vector<2x32xf32>
    %192 = arith.mulf %188, %173 : vector<2x32xf32>
    %193 = arith.mulf %187, %191 : vector<2x32xf32>
    %194 = arith.addf %192, %193 : vector<2x32xf32>
    %195 = math.tanh %194 : vector<2x32xf32>
    %196 = arith.mulf %189, %195 : vector<2x32xf32>
    %c0_37 = arith.constant 0 : index
    %c0_38 = arith.constant 0 : index
    %c0_39 = arith.constant 0 : index
    %197 = vector.load %arg14[%c0_37, %c0_38, %c0_39] : memref<2x2x32xf32, #tpu.memory_space<vmem>>, vector<1x2x32xf32>
    %198 = vector.shape_cast %197 : vector<1x2x32xf32> to vector<2x32xf32>
    %199 = vector.shape_cast %196 : vector<2x32xf32> to vector<1x2x32xf32>
    tpu.vector_store %arg14[%c0_37, %c0_38, %c0_39], %199 {strides = array<i32>} : memref<2x2x32xf32, #tpu.memory_space<vmem>>, vector<1x2x32xf32>,
    %c0_40 = arith.constant 0 : index
    %c0_41 = arith.constant 0 : index
    %c0_42 = arith.constant 0 : index
    %200 = vector.load %arg15[%c0_40, %c0_41, %c0_42] : memref<2x2x32xf32, #tpu.memory_space<vmem>>, vector<1x2x32xf32>
    %201 = vector.shape_cast %200 : vector<1x2x32xf32> to vector<2x32xf32>
    %202 = vector.shape_cast %194 : vector<2x32xf32> to vector<1x2x32xf32>
    tpu.vector_store %arg15[%c0_40, %c0_41, %c0_42], %202 {strides = array<i32>} : memref<2x2x32xf32, #tpu.memory_space<vmem>>, vector<1x2x32xf32>,
    %c0_43 = arith.constant 0 : index
    %c0_44 = arith.constant 0 : index
    %203 = vector.load %arg8[%c0_43, %c0_44] : memref<32x128xf32, #tpu.memory_space<vmem>>, vector<32x128xf32>
    %c0_45 = arith.constant 0 : index
    %c0_46 = arith.constant 0 : index
    %204 = vector.load %arg9[%c0_45, %c0_46] : memref<32x128xf32, #tpu.memory_space<vmem>>, vector<32x128xf32>
    %c0_47 = arith.constant 0 : index
    %c0_48 = arith.constant 0 : index
    %205 = vector.load %arg10[%c0_47, %c0_48] : memref<1x128xf32, #tpu.memory_space<vmem>>, vector<1x128xf32>
    %cst_49 = arith.constant dense<0.000000e+00> : vector<2x128xf32>
    %206 = tpu.matmul %196, %203, %cst_49 {dimension_numbers = #tpu.dot_dimension_numbers<[1], [0], [0], [1], [0, 0, 1, 1], [], []>} : vector<2x32xf32>, vector<32x128xf32>, vector<2x128xf32> -> vector<2x128xf32>
    %cst_50 = arith.constant dense<0.000000e+00> : vector<2x128xf32>
    %207 = tpu.matmul %173, %204, %cst_50 {dimension_numbers = #tpu.dot_dimension_numbers<[1], [0], [0], [1], [0, 0, 1, 1], [], []>} : vector<2x32xf32>, vector<32x128xf32>, vector<2x128xf32> -> vector<2x128xf32>
    %208 = arith.addf %206, %207 : vector<2x128xf32>
    %209 = vector.broadcast %205 : vector<1x128xf32> to vector<2x128xf32>
    %210 = arith.addf %208, %209 : vector<2x128xf32>
    %211 = arith.negf %210 : vector<2x128xf32>
    %212 = math.exp %211 : vector<2x128xf32>
    %cst_51 = arith.constant 1.000000e+00 : f32
    %213 = vector.broadcast %cst_51 : f32 to vector<2x128xf32>
    %214 = arith.addf %213, %212 : vector<2x128xf32>
    %215 = arith.divf %213, %214 : vector<2x128xf32>
    %216 = vector.extract_strided_slice %215 {offsets = [0, 0], sizes = [2, 32], strides = [1, 1]} : vector<2x128xf32> to vector<2x32xf32>
    %217 = vector.extract_strided_slice %215 {offsets = [0, 32], sizes = [2, 32], strides = [1, 1]} : vector<2x128xf32> to vector<2x32xf32>
    %218 = vector.extract_strided_slice %215 {offsets = [0, 96], sizes = [2, 32], strides = [1, 1]} : vector<2x128xf32> to vector<2x32xf32>
    %219 = vector.extract_strided_slice %210 {offsets = [0, 64], sizes = [2, 32], strides = [1, 1]} : vector<2x128xf32> to vector<2x32xf32>
    %220 = math.tanh %219 : vector<2x32xf32>
    %221 = arith.mulf %217, %173 : vector<2x32xf32>
    %222 = arith.mulf %216, %220 : vector<2x32xf32>
    %223 = arith.addf %221, %222 : vector<2x32xf32>
    %224 = math.tanh %223 : vector<2x32xf32>
    %225 = arith.mulf %218, %224 : vector<2x32xf32>
    %c1 = arith.constant 1 : index
    %c0_52 = arith.constant 0 : index
    %c0_53 = arith.constant 0 : index
    %226 = vector.load %arg14[%c1, %c0_52, %c0_53] : memref<2x2x32xf32, #tpu.memory_space<vmem>>, vector<1x2x32xf32>
    %227 = vector.shape_cast %226 : vector<1x2x32xf32> to vector<2x32xf32>
    %228 = vector.shape_cast %225 : vector<2x32xf32> to vector<1x2x32xf32>
    tpu.vector_store %arg14[%c1, %c0_52, %c0_53], %228 {strides = array<i32>} : memref<2x2x32xf32, #tpu.memory_space<vmem>>, vector<1x2x32xf32>,
    %c1_54 = arith.constant 1 : index
    %c0_55 = arith.constant 0 : index
    %c0_56 = arith.constant 0 : index
    %229 = vector.load %arg15[%c1_54, %c0_55, %c0_56] : memref<2x2x32xf32, #tpu.memory_space<vmem>>, vector<1x2x32xf32>
    %230 = vector.shape_cast %229 : vector<1x2x32xf32> to vector<2x32xf32>
    %231 = vector.shape_cast %223 : vector<2x32xf32> to vector<1x2x32xf32>
    tpu.vector_store %arg15[%c1_54, %c0_55, %c0_56], %231 {strides = array<i32>} : memref<2x2x32xf32, #tpu.memory_space<vmem>>, vector<1x2x32xf32>,
    %c0_57 = arith.constant 0 : index
    %c0_58 = arith.constant 0 : index
    %232 = vector.load %arg11[%c0_57, %c0_58] : memref<32x50xf32, #tpu.memory_space<vmem>>, vector<32x50xf32>
    %cst_59 = arith.constant dense<0.000000e+00> : vector<2x50xf32>
    %233 = tpu.matmul %225, %232, %cst_59 {dimension_numbers = #tpu.dot_dimension_numbers<[1], [0], [0], [1], [0, 0, 1, 1], [], []>} : vector<2x32xf32>, vector<32x50xf32>, vector<2x50xf32> -> vector<2x50xf32>
    %c0_60 = arith.constant 0 : index
    %c0_61 = arith.constant 0 : index
    %234 = vector.load %arg12[%c0_60, %c0_61] : memref<1x50xf32, #tpu.memory_space<vmem>>, vector<1x50xf32>
    %235 = vector.broadcast %234 : vector<1x50xf32> to vector<2x50xf32>
    %236 = arith.addf %233, %235 : vector<2x50xf32>
    %c0_62 = arith.constant 0 : index
    %c0_63 = arith.constant 0 : index
    %237 = vector.load %arg13[%c0_62, %c0_63] : memref<2x50xf32, #tpu.memory_space<vmem>>, vector<2x50xf32>
    tpu.vector_store %arg13[%c0_62, %c0_63], %236 {strides = array<i32>} : memref<2x50xf32, #tpu.memory_space<vmem>>, vector<2x50xf32>,
    return
  }
}

</mosaic_0001>

<llo_original>
// kernel: decoder_forward.1
$region0: #{decoder_forward.1}
  #allocation0 [shape = 'u32[]', space=smem, size = 0x4, offset = 0x4, fixed_abs, tag = 'smem constant byte address 0x4 - core index']
  #allocation1 [shape = 'u32[72,128]{1,0:T(1,128)}', space=vmem, size = 0x9000, scoped, tag = 'internal scratch']
  #allocation2 [shape = 'f32[1,1]{1,0:T(1,128)S(1)}', space=vmem, size = 0x200, scoped, tag = 'scoped memory for decoder_forward.1']
  %s0 = inlined_call_operand.hbm [shape: f32[8,2,64], index: 0, kind: input, shape index: {}]
  %s1 = inlined_call_operand.vmem [shape: f32[2,32], index: 1, kind: input, shape index: {}]
  %s2 = inlined_call_operand.vmem [shape: f32[2,32], index: 2, kind: input, shape index: {}]
  %s3 = inlined_call_operand.vmem [shape: f32[1,96], index: 3, kind: input, shape index: {}]
  %s4 = inlined_call_operand.<no memory space> [shape: f32[1,1], index: 4, kind: input, shape index: {}]
  %s5 = inlined_call_operand.vmem [shape: f32[96,128], index: 5, kind: input, shape index: {}]
  %s6 = inlined_call_operand.vmem [shape: f32[32,128], index: 6, kind: input, shape index: {}]
  %s7 = inlined_call_operand.hbm [shape: f32[1,128], index: 7, kind: input, shape index: {}]
  %s8 = inlined_call_operand.hbm [shape: f32[32,128], index: 8, kind: input, shape index: {}]
  %s9 = inlined_call_operand.hbm [shape: f32[32,128], index: 9, kind: input, shape index: {}]
  %s10 = inlined_call_operand.hbm [shape: f32[1,128], index: 10, kind: input, shape index: {}]
  %s11 = inlined_call_operand.hbm [shape: f32[32,50], index: 11, kind: input, shape index: {}]
  %s12 = inlined_call_operand.vmem [shape: f32[1,50], index: 12, kind: input, shape index: {}]
  %s13 = inlined_call_operand.hbm [shape: f32[2,50], index: 13, kind: output, shape index: {0}]
  %s14 = inlined_call_operand.hbm [shape: f32[2,2,32], index: 14, kind: output, shape index: {1}]
  %s15 = inlined_call_operand.hbm [shape: f32[2,2,32], index: 15, kind: output, shape index: {2}]
  %16 = xla_tuple %s13, %s14, %s15
  %s17 = sld [smem:[#allocation0]]
  $region102: #{decoder_forward.1} parent=0
    _
  %s19 = ssub.s32 1, %s17
  %s20 = scalar_select 0, %s19, %s17
  %v21 = vstv %s4
  %22 = vst [vmem:[#allocation2] sm:$0x1] %v21
  $region1: #{decoder_forward.1} parent=0
    #allocation3 [shape = 'u8[8192]{0}', space=vmem, size = 0x2000, scoped, tag = 'input window, operand 0, single buffered']
    #allocation4 [shape = 's32[1]{0}', space=sflag, size = 0x4, scoped, tag = 'scoped memory for decoder_forward.1']
    #allocation5 [shape = 's32[1]{0}', space=sflag, size = 0x4, scoped, tag = 'scoped memory for decoder_forward.1']
    #allocation6 [shape = 'u8[512]{0}', space=vmem, size = 0x400, scoped, tag = 'input window, operand 7, single buffered']
    #allocation7 [shape = 's32[1]{0}', space=sflag, size = 0x4, scoped, tag = 'scoped memory for decoder_forward.1']
    #allocation8 [shape = 'u8[16384]{0}', space=vmem, size = 0x4000, scoped, tag = 'input window, operand 8, single buffered']
    #allocation9 [shape = 'u8[16384]{0}', space=vmem, size = 0x4000, scoped, tag = 'input window, operand 9, single buffered']
    #allocation10 [shape = 's32[1]{0}', space=sflag, size = 0x4, scoped, tag = 'scoped memory for decoder_forward.1']
    #allocation11 [shape = 'u8[512]{0}', space=vmem, size = 0x400, scoped, tag = 'input window, operand 10, single buffered']
    #allocation12 [shape = 'u8[16384]{0}', space=vmem, size = 0x4000, scoped, tag = 'input window, operand 11, single buffered']
    #allocation13 [shape = 's32[1]{0}', space=sflag, size = 0x4, scoped, tag = 'scoped memory for decoder_forward.1']
    #allocation14 [shape = 'u8[1024]{0}', space=vmem, size = 0x400, scoped, tag = 'output window, operand 0, single buffered']
    #allocation15 [shape = 'u8[2048]{0}', space=vmem, size = 0x800, scoped, tag = 'output window, operand 1, single buffered']
    #allocation16 [shape = 's32[1]{0}', space=sflag, size = 0x4, scoped, tag = 'scoped memory for decoder_forward.1']
    #allocation17 [shape = 'u8[2048]{0}', space=vmem, size = 0x800, scoped, tag = 'output window, operand 2, single buffered']
    %23 = vsyncpa [#allocation4], 0
    %24 = vsyncpa [#allocation7], 0
    %25 = vsyncpa [#allocation10], 0
    %26 = vsyncpa [#allocation13], 0
    %27 = vsyncpa [#allocation5], 0
    %28 = vsyncpa [#allocation16], 0
    // Predicated region
    $region2: #{decoder_forward.1} parent=1 // pred_check
      _
    $region3: #{decoder_forward.1} parent=1 // pred_check_branch
      %30 = sbr.rel (0) target = $region5
    $region4: #{decoder_forward.1} parent=1 // pred_region
      %32 = vsyncadd [#allocation4], 0
      %s33 = sshll.u32 %s0, 4
      %s34 = int_to_ptr.hbm [resolvable:$true] %s33
      %s35 = sshll.u32 [#allocation3], 4
      %s36 = int_to_ptr.vmem [resolvable:$true] %s35
      %41 = dma.hbm_to_vmem [thread:$0]  %s34, 256, %s36, [#allocation4], 32, 32, 2
    $region5: #{decoder_forward.1} parent=1 // pred_fallthru
      _
    // Predicated region
    $region6: #{decoder_forward.1} parent=1 // pred_check
      _
    $region7: #{decoder_forward.1} parent=1 // pred_check_branch
      %43 = sbr.rel (0) target = $region9
    $region8: #{decoder_forward.1} parent=1 // pred_region
      _
    $region9: #{decoder_forward.1} parent=1 // pred_fallthru
      _
    // Predicated region
    $region10: #{decoder_forward.1} parent=1 // pred_check
      _
    $region11: #{decoder_forward.1} parent=1 // pred_check_branch
      %45 = sbr.rel (0) target = $region13
    $region12: #{decoder_forward.1} parent=1 // pred_region
      _
    $region13: #{decoder_forward.1} parent=1 // pred_fallthru
      _
    // Predicated region
    $region14: #{decoder_forward.1} parent=1 // pred_check
      _
    $region15: #{decoder_forward.1} parent=1 // pred_check_branch
      %47 = sbr.rel (0) target = $region17
    $region16: #{decoder_forward.1} parent=1 // pred_region
      _
    $region17: #{decoder_forward.1} parent=1 // pred_fallthru
      _
    // Predicated region
    $region18: #{decoder_forward.1} parent=1 // pred_check
      _
    $region19: #{decoder_forward.1} parent=1 // pred_check_branch
      %49 = sbr.rel (0) target = $region21
    $region20: #{decoder_forward.1} parent=1 // pred_region
      _
    $region21: #{decoder_forward.1} parent=1 // pred_fallthru
      _
    // Predicated region
    $region22: #{decoder_forward.1} parent=1 // pred_check
      _
    $region23: #{decoder_forward.1} parent=1 // pred_check_branch
      %51 = sbr.rel (0) target = $region25
    $region24: #{decoder_forward.1} parent=1 // pred_region
      _
    $region25: #{decoder_forward.1} parent=1 // pred_fallthru
      _
    // Predicated region
    $region26: #{decoder_forward.1} parent=1 // pred_check
      _
    $region27: #{decoder_forward.1} parent=1 // pred_check_branch
      %53 = sbr.rel (0) target = $region29
    $region28: #{decoder_forward.1} parent=1 // pred_region
      _
    $region29: #{decoder_forward.1} parent=1 // pred_fallthru
      _
    // Predicated region
    $region30: #{decoder_forward.1} parent=1 // pred_check
      _
    $region31: #{decoder_forward.1} parent=1 // pred_check_branch
      %55 = sbr.rel (0) target = $region33
    $region32: #{decoder_forward.1} parent=1 // pred_region
      %57 = vsyncadd [#allocation7], 0
      %s59 = sshll.u32 %s7, 4
      %s60 = int_to_ptr.hbm [resolvable:$true] %s59
      %s61 = sshll.u32 [#allocation6], 4
      %s62 = int_to_ptr.vmem [resolvable:$true] %s61
      %64 = dma.hbm_to_vmem [thread:$0]  %s60, 16, %s62, [#allocation7]
    $region33: #{decoder_forward.1} parent=1 // pred_fallthru
      _
    // Predicated region
    $region34: #{decoder_forward.1} parent=1 // pred_check
      _
    $region35: #{decoder_forward.1} parent=1 // pred_check_branch
      %66 = sbr.rel (0) target = $region37
    $region36: #{decoder_forward.1} parent=1 // pred_region
      %68 = vsyncadd [#allocation7], 0
      %s69 = sshll.u32 %s8, 4
      %s70 = int_to_ptr.hbm [resolvable:$true] %s69
      %s71 = sshll.u32 [#allocation8], 4
      %s72 = int_to_ptr.vmem [resolvable:$true] %s71
      %77 = dma.hbm_to_vmem [thread:$0]  %s70, 512, %s72, [#allocation7], 128, 128, 8
    $region37: #{decoder_forward.1} parent=1 // pred_fallthru
      _
    // Predicated region
    $region38: #{decoder_forward.1} parent=1 // pred_check
      _
    $region39: #{decoder_forward.1} parent=1 // pred_check_branch
      %79 = sbr.rel (0) target = $region41
    $region40: #{decoder_forward.1} parent=1 // pred_region
      %81 = vsyncadd [#allocation10], 0
      %s82 = sshll.u32 %s9, 4
      %s83 = int_to_ptr.hbm [resolvable:$true] %s82
      %s84 = sshll.u32 [#allocation9], 4
      %s85 = int_to_ptr.vmem [resolvable:$true] %s84
      %90 = dma.hbm_to_vmem [thread:$0]  %s83, 512, %s85, [#allocation10], 128, 128, 8
    $region41: #{decoder_forward.1} parent=1 // pred_fallthru
      _
    // Predicated region
    $region42: #{decoder_forward.1} parent=1 // pred_check
      _
    $region43: #{decoder_forward.1} parent=1 // pred_check_branch
      %92 = sbr.rel (0) target = $region45
    $region44: #{decoder_forward.1} parent=1 // pred_region
      %94 = vsyncadd [#allocation10], 0
      %s96 = sshll.u32 %s10, 4
      %s97 = int_to_ptr.hbm [resolvable:$true] %s96
      %s98 = sshll.u32 [#allocation11], 4
      %s99 = int_to_ptr.vmem [resolvable:$true] %s98
      %101 = dma.hbm_to_vmem [thread:$0]  %s97, 16, %s99, [#allocation10]
    $region45: #{decoder_forward.1} parent=1 // pred_fallthru
      _
    // Predicated region
    $region46: #{decoder_forward.1} parent=1 // pred_check
      _
    $region47: #{decoder_forward.1} parent=1 // pred_check_branch
      %103 = sbr.rel (0) target = $region49
    $region48: #{decoder_forward.1} parent=1 // pred_region
      %105 = vsyncadd [#allocation13], 0
      %s106 = sshll.u32 %s11, 4
      %s107 = int_to_ptr.hbm [resolvable:$true] %s106
      %s108 = sshll.u32 [#allocation12], 4
      %s109 = int_to_ptr.vmem [resolvable:$true] %s108
      %114 = dma.hbm_to_vmem [thread:$0]  %s107, 512, %s109, [#allocation13], 128, 128, 8
    $region49: #{decoder_forward.1} parent=1 // pred_fallthru
      _
    // Predicated region
    $region50: #{decoder_forward.1} parent=1 // pred_check
      _
    $region51: #{decoder_forward.1} parent=1 // pred_check_branch
      %116 = sbr.rel (0) target = $region53
    $region52: #{decoder_forward.1} parent=1 // pred_region
      _
    $region53: #{decoder_forward.1} parent=1 // pred_fallthru
      _
    // Predicated region
    $region54: #{decoder_forward.1} parent=1 // pred_check
      _
    $region55: #{decoder_forward.1} parent=1 // pred_check_branch
      %118 = sbr.rel (0) target = $region57
    $region56: #{decoder_forward.1} parent=1 // pred_region
      %120 = dma.done [#allocation4], 256
    $region57: #{decoder_forward.1} parent=1 // pred_fallthru
      _
    // Predicated region
    $region58: #{decoder_forward.1} parent=1 // pred_check
      _
    $region59: #{decoder_forward.1} parent=1 // pred_check_branch
      %122 = sbr.rel (0) target = $region61
    $region60: #{decoder_forward.1} parent=1 // pred_region
      %124 = dma.done [#allocation7], 16
    $region61: #{decoder_forward.1} parent=1 // pred_fallthru
      _
    // Predicated region
    $region62: #{decoder_forward.1} parent=1 // pred_check
      _
    $region63: #{decoder_forward.1} parent=1 // pred_check_branch
      %126 = sbr.rel (0) target = $region65
    $region64: #{decoder_forward.1} parent=1 // pred_region
      %128 = dma.done [#allocation7], 512
    $region65: #{decoder_forward.1} parent=1 // pred_fallthru
      _
    // Predicated region
    $region66: #{decoder_forward.1} parent=1 // pred_check
      _
    $region67: #{decoder_forward.1} parent=1 // pred_check_branch
      %130 = sbr.rel (0) target = $region69
    $region68: #{decoder_forward.1} parent=1 // pred_region
      %132 = dma.done [#allocation10], 512
    $region69: #{decoder_forward.1} parent=1 // pred_fallthru
      _
    // Predicated region
    $region70: #{decoder_forward.1} parent=1 // pred_check
      _
    $region71: #{decoder_forward.1} parent=1 // pred_check_branch
      %134 = sbr.rel (0) target = $region73
    $region72: #{decoder_forward.1} parent=1 // pred_region
      %136 = dma.done [#allocation10], 16
    $region73: #{decoder_forward.1} parent=1 // pred_fallthru
      _
    // Predicated region
    $region74: #{decoder_forward.1} parent=1 // pred_check
      _
    $region75: #{decoder_forward.1} parent=1 // pred_check_branch
      %138 = sbr.rel (0) target = $region77
    $region76: #{decoder_forward.1} parent=1 // pred_region
      %140 = dma.done [#allocation13], 512
    $region77: #{decoder_forward.1} parent=1 // pred_fallthru
      _
    %v141 = vld [vmem:[#allocation3] sm:$0x3]
    %v142 = vld [vmem:[#allocation3 + $0x2] sm:$0x3]
    %v143 = vld [vmem:[#allocation3 + $0x4] sm:$0x3]
    %v144 = vld [vmem:[#allocation3 + $0x6] sm:$0x3]
    %v145 = vld [vmem:[#allocation3 + $0x8] sm:$0x3]
    %v146 = vld [vmem:[#allocation3 + $0xa] sm:$0x3]
    %v147 = vld [vmem:[#allocation3 + $0xc] sm:$0x3]
    %v148 = vld [vmem:[#allocation3 + $0xe] sm:$0x3]
    %v149 = vld [vmem:[%s1] sm:$0x3]
    %v150 = vld [vmem:[%s3] sm:$0x1]
    %v151 = vld [vmem:[#allocation2] sm:$0x1]
    %v153 = vperm.slane %v150, 0
    %v155 = vmul.f32 %v149, %v153
    %vm156 = vcmask 254976
    %v157 = vsel %vm156, %v155, 0.0
    %158 = vadd.xlane.f32.xlu0 %v157
    %v159 = vpop.xlane.xlu0 %158
    %160 = vrot.lane.b32.xlu0 %v153, 96
    %v161 = vpop.permute.xlu0 %160
    %v163 = vmul.f32 %v141, %v161
    %vm164 = vcmask 517120
    %v165 = vsel %vm164, %v163, 0.0
    %166 = vadd.xlane.f32.xlu0 %v165
    %v167 = vpop.xlane.xlu0 %166
    %v168 = vadd.f32 %v167, %v159
    %v170 = vperm.slane %v151, 0
    %v172 = vadd.f32 %v168, %v170
    %v173 = vmax.f32 %v172, 0.0
    %v174 = vmul.f32 %v142, %v161
    %v175 = vsel %vm164, %v174, 0.0
    %176 = vadd.xlane.f32.xlu0 %v175
    %v177 = vpop.xlane.xlu0 %176
    %v178 = vadd.f32 %v177, %v159
    %v179 = vadd.f32 %v178, %v170
    %v180 = vmax.f32 %v179, 0.0
    %v181 = vmul.f32 %v143, %v161
    %v182 = vsel %vm164, %v181, 0.0
    %183 = vadd.xlane.f32.xlu0 %v182
    %v184 = vpop.xlane.xlu0 %183
    %v185 = vadd.f32 %v184, %v159
    %v186 = vadd.f32 %v185, %v170
    %v187 = vmax.f32 %v186, 0.0
    %v188 = vmul.f32 %v144, %v161
    %v189 = vsel %vm164, %v188, 0.0
    %190 = vadd.xlane.f32.xlu0 %v189
    %v191 = vpop.xlane.xlu0 %190
    %v192 = vadd.f32 %v191, %v159
    %v193 = vadd.f32 %v192, %v170
    %v194 = vmax.f32 %v193, 0.0
    %v195 = vmul.f32 %v145, %v161
    %v196 = vsel %vm164, %v195, 0.0
    %197 = vadd.xlane.f32.xlu0 %v196
    %v198 = vpop.xlane.xlu0 %197
    %v199 = vadd.f32 %v198, %v159
    %v200 = vadd.f32 %v199, %v170
    %v201 = vmax.f32 %v200, 0.0
    %v202 = vmul.f32 %v146, %v161
    %v203 = vsel %vm164, %v202, 0.0
    %204 = vadd.xlane.f32.xlu0 %v203
    %v205 = vpop.xlane.xlu0 %204
    %v206 = vadd.f32 %v205, %v159
    %v207 = vadd.f32 %v206, %v170
    %v208 = vmax.f32 %v207, 0.0
    %v209 = vmul.f32 %v147, %v161
    %v210 = vsel %vm164, %v209, 0.0
    %211 = vadd.xlane.f32.xlu0 %v210
    %v212 = vpop.xlane.xlu0 %211
    %v213 = vadd.f32 %v212, %v159
    %v214 = vadd.f32 %v213, %v170
    %v215 = vmax.f32 %v214, 0.0
    %v216 = vmul.f32 %v148, %v161
    %v217 = vsel %vm164, %v216, 0.0
    %218 = vadd.xlane.f32.xlu0 %v217
    %v219 = vpop.xlane.xlu0 %218
    %v220 = vadd.f32 %v219, %v159
    %v221 = vadd.f32 %v220, %v170
    %v222 = vmax.f32 %v221, 0.0
    %v223 = vmax.f32 %v173, %v180
    %v224 = vmax.f32 %v223, %v187
    %v225 = vmax.f32 %v224, %v194
    %v226 = vmax.f32 %v225, %v201
    %v227 = vmax.f32 %v226, %v208
    %v228 = vmax.f32 %v227, %v215
    %v229 = vmax.f32 %v228, %v222
    %v230 = vsub.f32 %v173, %v229
    %v231 = vmul.f32 %v230, 1.442695
    %v232 = vpow.pop %v231
    %v233 = vsub.f32 %v180, %v229
    %v234 = vmul.f32 %v233, 1.442695
    %v235 = vpow.pop %v234
    %v236 = vsub.f32 %v187, %v229
    %v237 = vmul.f32 %v236, 1.442695
    %v238 = vpow.pop %v237
    %v239 = vsub.f32 %v194, %v229
    %v240 = vmul.f32 %v239, 1.442695
    %v241 = vpow.pop %v240
    %v242 = vsub.f32 %v201, %v229
    %v243 = vmul.f32 %v242, 1.442695
    %v244 = vpow.pop %v243
    %v245 = vsub.f32 %v208, %v229
    %v246 = vmul.f32 %v245, 1.442695
    %v247 = vpow.pop %v246
    %v248 = vsub.f32 %v215, %v229
    %v249 = vmul.f32 %v248, 1.442695
    %v250 = vpow.pop %v249
    %v251 = vsub.f32 %v222, %v229
    %v252 = vmul.f32 %v251, 1.442695
    %v253 = vpow.pop %v252
    %v254 = vadd.f32 %v232, %v235
    %v255 = vadd.f32 %v254, %v238
    %v256 = vadd.f32 %v255, %v241
    %v257 = vadd.f32 %v256, %v244
    %v258 = vadd.f32 %v257, %v247
    %v259 = vadd.f32 %v258, %v250
    %v260 = vadd.f32 %v259, %v253
    %262 = vset.pattern.permute.xlu0 0
    %263 = vperm.xlu0 %262, %v232
    %v264 = vpop.permute.xlu0 %263
    %v266 = vmul.f32 %v264, %v141
    %268 = vset.pattern.permute.xlu0 0
    %269 = vperm.xlu0 %268, %v235
    %v270 = vpop.permute.xlu0 %269
    %v272 = vmul.f32 %v270, %v142
    %v273 = vadd.f32 %v266, %v272
    %275 = vset.pattern.permute.xlu0 0
    %276 = vperm.xlu0 %275, %v238
    %v277 = vpop.permute.xlu0 %276
    %v279 = vmul.f32 %v277, %v143
    %v280 = vadd.f32 %v273, %v279
    %282 = vset.pattern.permute.xlu0 0
    %283 = vperm.xlu0 %282, %v241
    %v284 = vpop.permute.xlu0 %283
    %v286 = vmul.f32 %v284, %v144
    %v287 = vadd.f32 %v280, %v286
    %289 = vset.pattern.permute.xlu0 0
    %290 = vperm.xlu0 %289, %v244
    %v291 = vpop.permute.xlu0 %290
    %v293 = vmul.f32 %v291, %v145
    %v294 = vadd.f32 %v287, %v293
    %296 = vset.pattern.permute.xlu0 0
    %297 = vperm.xlu0 %296, %v247
    %v298 = vpop.permute.xlu0 %297
    %v300 = vmul.f32 %v298, %v146
    %v301 = vadd.f32 %v294, %v300
    %303 = vset.pattern.permute.xlu0 0
    %304 = vperm.xlu0 %303, %v250
    %v305 = vpop.permute.xlu0 %304
    %v307 = vmul.f32 %v305, %v147
    %v308 = vadd.f32 %v301, %v307
    %310 = vset.pattern.permute.xlu0 0
    %311 = vperm.xlu0 %310, %v253
    %v312 = vpop.permute.xlu0 %311
    %v314 = vmul.f32 %v312, %v148
    %v315 = vadd.f32 %v308, %v314
    %v316 = vrcp.pop %v260
    %v317 = vmul.f32 %v260, %v316
    %v318 = vsub.f32 1.0, %v317
    %v319 = vmul.f32 %v316, %v318
    %v320 = vadd.f32 %v316, %v319
    %vm321 = vweird.f32 %v260
    %vm322 = vweird.f32 %v316
    %vm323 = vmor %vm321, %vm322
    %v324 = vsel %vm323, %v316, %v320
    %v325 = vand.u32 2147483647, %v260
    %vm326 = vcmp.eq.f32.partialorder %v325, 8.507059e+37
    %v327 = vand.u32 %v260, 2147483648
    %v328 = vor.u32 1.1754944e-38, %v327
    %v329 = vsel %vm326, %v328, %v324
    %v330 = vmul.f32 1.0, %v329
    %332 = vset.pattern.permute.xlu0 0
    %333 = vperm.xlu0 %332, %v330
    %v334 = vpop.permute.xlu0 %333
    %v336 = vmul.f32 %v315, %v334
    %v337 = vld [vmem:[%s2] sm:$0x3]
    %339 = vrot.lane.b32.xlu0 %v337, 64
    %v340 = vpop.permute.xlu0 %339
    %vm342 = vcmask 523264
    %v343 = vsel %vm342, %v336, %v340
    %v344 = vld [vmem:[%s5] sm:$0xff]
    %v345 = vld [vmem:[%s5 + $0x8] sm:$0xff]
    %v346 = vld [vmem:[%s5 + $0x10] sm:$0xff]
    %v347 = vld [vmem:[%s5 + $0x18] sm:$0xff]
    %v348 = vld [vmem:[%s5 + $0x20] sm:$0xff]
    %v349 = vld [vmem:[%s5 + $0x28] sm:$0xff]
    %v350 = vld [vmem:[%s5 + $0x30] sm:$0xff]
    %v351 = vld [vmem:[%s5 + $0x38] sm:$0xff]
    %v352 = vld [vmem:[%s5 + $0x40] sm:$0xff]
    %v353 = vld [vmem:[%s5 + $0x48] sm:$0xff]
    %v354 = vld [vmem:[%s5 + $0x50] sm:$0xff]
    %v355 = vld [vmem:[%s5 + $0x58] sm:$0xff]
    %v356 = vld [vmem:[%s6] sm:$0xff]
    %v357 = vld [vmem:[%s6 + $0x8] sm:$0xff]
    %v358 = vld [vmem:[%s6 + $0x10] sm:$0xff]
    %v359 = vld [vmem:[%s6 + $0x18] sm:$0xff]
    %v360 = vld [vmem:[#allocation6] sm:$0x1]
    %vm361 = vcmask 261120
    %v363 = vsel %vm361, 0.0, 0
    %365 = vmatpush.msra.mxu0 0.0
    %366 = vmatpush.msra.mxu0 0.0
    %367 = vmatpush.msra.mxu0 0.0
    %368 = vmatpush.msra.mxu0 0.0
    %369 = vmatpush.msra.mxu0 0.0
    %370 = vmatpush.msra.mxu0 0.0
    %371 = vmatpush.msra.mxu0 0.0
    %372 = vmatpush.msra.mxu0 0.0
    %373 = vmatpush.msra.mxu0 0.0
    %374 = vmatpush.msra.mxu0 0.0
    %375 = vmatpush.msra.mxu0 0.0
    %376 = vmatpush.msra.mxu0 0.0
    %377 = vmatpush.msra.mxu0 %v359
    %378 = vmatpush.msra.mxu0 %v358
    %379 = vmatpush.msra.mxu0 %v357
    %380 = vmatpush.msra.mxu0 %v356
    %381 = vmatmul.f32.gmra.mxu0 %v363
    %v382 = vpop.f32.mrf.mxu0
    %v383 = vadd.f32 0.0, %v382
    %384 = vdwg.mxu0
    %vm385 = vcmask 785408
    %v387 = vsel %vm385, %v343, 0
    %389 = vmatpush.msra.mxu0 0.0
    %390 = vmatpush.msra.mxu0 0.0
    %391 = vmatpush.msra.mxu0 0.0
    %392 = vmatpush.msra.mxu0 0.0
    %393 = vmatpush.msra.mxu0 %v355
    %394 = vmatpush.msra.mxu0 %v354
    %395 = vmatpush.msra.mxu0 %v353
    %396 = vmatpush.msra.mxu0 %v352
    %397 = vmatpush.msra.mxu0 %v351
    %398 = vmatpush.msra.mxu0 %v350
    %399 = vmatpush.msra.mxu0 %v349
    %400 = vmatpush.msra.mxu0 %v348
    %401 = vmatpush.msra.mxu0 %v347
    %402 = vmatpush.msra.mxu0 %v346
    %403 = vmatpush.msra.mxu0 %v345
    %404 = vmatpush.msra.mxu0 %v344
    %405 = vmatmul.f32.gmra.mxu0 %v387
    %v406 = vpop.f32.mrf.mxu0
    %v407 = vadd.f32 %v383, %v406
    %408 = vdwg.mxu0
    %v410 = vperm.slane %v360, 0
    %v412 = vadd.f32 %v407, %v410
    %v413 = vxor.u32 %v412, 2147483648
    %v414 = vmul.f32 %v413, 1.442695
    %v415 = vpow.pop %v414
    %v416 = vadd.f32 %v415, 1.0
    %v417 = vrcp.pop %v416
    %v418 = vmul.f32 %v416, %v417
    %v419 = vsub.f32 1.0, %v418
    %v420 = vmul.f32 %v417, %v419
    %v421 = vadd.f32 %v417, %v420
    %vm422 = vweird.f32 %v416
    %vm423 = vweird.f32 %v417
    %vm424 = vmor %vm422, %vm423
    %v425 = vsel %vm424, %v417, %v421
    %v426 = vand.u32 2147483647, %v416
    %vm427 = vcmp.eq.f32.partialorder %v426, 8.507059e+37
    %v428 = vand.u32 %v416, 2147483648
    %v429 = vor.u32 1.1754944e-38, %v428
    %v430 = vsel %vm427, %v429, %v425
    %v431 = vmul.f32 1.0, %v430
    %v432 = vtanh.pop %v412
    %v433 = vmul.f32 %v431, 0.0
    %435 = vrot.lane.b32.xlu0 %v432, 64
    %v436 = vpop.permute.xlu0 %435
    %v438 = vmul.f32 %v431, %v436
    %440 = vrot.lane.b32.xlu0 %v438, 32
    %v441 = vpop.permute.xlu0 %440
    %v443 = vadd.f32 %v433, %v441
    %v444 = vtanh.pop %v443
    %446 = vrot.lane.b32.xlu0 %v444, 64
    %v447 = vpop.permute.xlu0 %446
    %v449 = vmul.f32 %v431, %v447
    %451 = vrot.lane.b32.xlu0 %v449, 32
    %v452 = vpop.permute.xlu0 %451
    %454 = vst.msk [vmem:[#allocation15] sm:$0x3] %vm156, %v452
    %456 = vrot.lane.b32.xlu0 %v443, 96
    %v457 = vpop.permute.xlu0 %456
    %459 = vst.msk [vmem:[#allocation17] sm:$0x3] %vm156, %v457
    %v460 = vld [vmem:[#allocation8] sm:$0xff]
    %v461 = vld [vmem:[#allocation8 + $0x8] sm:$0xff]
    %v462 = vld [vmem:[#allocation8 + $0x10] sm:$0xff]
    %v463 = vld [vmem:[#allocation8 + $0x18] sm:$0xff]
    %v464 = vld [vmem:[#allocation9] sm:$0xff]
    %v465 = vld [vmem:[#allocation9 + $0x8] sm:$0xff]
    %v466 = vld [vmem:[#allocation9 + $0x10] sm:$0xff]
    %v467 = vld [vmem:[#allocation9 + $0x18] sm:$0xff]
    %v468 = vld [vmem:[#allocation11] sm:$0x1]
    %469 = vmatpush.msra.mxu0 0.0
    %470 = vmatpush.msra.mxu0 0.0
    %471 = vmatpush.msra.mxu0 0.0
    %472 = vmatpush.msra.mxu0 0.0
    %473 = vmatpush.msra.mxu0 0.0
    %474 = vmatpush.msra.mxu0 0.0
    %475 = vmatpush.msra.mxu0 0.0
    %476 = vmatpush.msra.mxu0 0.0
    %477 = vmatpush.msra.mxu0 0.0
    %478 = vmatpush.msra.mxu0 0.0
    %479 = vmatpush.msra.mxu0 0.0
    %480 = vmatpush.msra.mxu0 0.0
    %481 = vmatpush.msra.mxu0 %v467
    %482 = vmatpush.msra.mxu0 %v466
    %483 = vmatpush.msra.mxu0 %v465
    %484 = vmatpush.msra.mxu0 %v464
    %485 = vmatmul.f32.gmra.mxu0 %v363
    %v486 = vpop.f32.mrf.mxu0
    %v487 = vadd.f32 0.0, %v486
    %488 = vdwg.mxu0
    %v489 = vsel %vm361, %v452, 0
    %491 = vmatpush.msra.mxu0 0.0
    %492 = vmatpush.msra.mxu0 0.0
    %493 = vmatpush.msra.mxu0 0.0
    %494 = vmatpush.msra.mxu0 0.0
    %495 = vmatpush.msra.mxu0 0.0
    %496 = vmatpush.msra.mxu0 0.0
    %497 = vmatpush.msra.mxu0 0.0
    %498 = vmatpush.msra.mxu0 0.0
    %499 = vmatpush.msra.mxu0 0.0
    %500 = vmatpush.msra.mxu0 0.0
    %501 = vmatpush.msra.mxu0 0.0
    %502 = vmatpush.msra.mxu0 0.0
    %503 = vmatpush.msra.mxu0 %v463
    %504 = vmatpush.msra.mxu0 %v462
    %505 = vmatpush.msra.mxu0 %v461
    %506 = vmatpush.msra.mxu0 %v460
    %507 = vmatmul.f32.gmra.mxu0 %v489
    %v508 = vpop.f32.mrf.mxu0
    %v509 = vadd.f32 %v487, %v508
    %510 = vdwg.mxu0
    %v512 = vperm.slane %v468, 0
    %v514 = vadd.f32 %v509, %v512
    %v515 = vxor.u32 %v514, 2147483648
    %v516 = vmul.f32 %v515, 1.442695
    %v517 = vpow.pop %v516
    %v518 = vadd.f32 %v517, 1.0
    %v519 = vrcp.pop %v518
    %v520 = vmul.f32 %v518, %v519
    %v521 = vsub.f32 1.0, %v520
    %v522 = vmul.f32 %v519, %v521
    %v523 = vadd.f32 %v519, %v522
    %vm524 = vweird.f32 %v518
    %vm525 = vweird.f32 %v519
    %vm526 = vmor %vm524, %vm525
    %v527 = vsel %vm526, %v519, %v523
    %v528 = vand.u32 2147483647, %v518
    %vm529 = vcmp.eq.f32.partialorder %v528, 8.507059e+37
    %v530 = vand.u32 %v518, 2147483648
    %v531 = vor.u32 1.1754944e-38, %v530
    %v532 = vsel %vm529, %v531, %v527
    %v533 = vmul.f32 1.0, %v532
    %v534 = vtanh.pop %v514
    %v535 = vmul.f32 %v533, 0.0
    %537 = vrot.lane.b32.xlu0 %v534, 64
    %v538 = vpop.permute.xlu0 %537
    %v540 = vmul.f32 %v533, %v538
    %542 = vrot.lane.b32.xlu0 %v540, 32
    %v543 = vpop.permute.xlu0 %542
    %v545 = vadd.f32 %v535, %v543
    %v546 = vtanh.pop %v545
    %548 = vrot.lane.b32.xlu0 %v546, 64
    %v549 = vpop.permute.xlu0 %548
    %v551 = vmul.f32 %v533, %v549
    %553 = vrot.lane.b32.xlu0 %v551, 32
    %v554 = vpop.permute.xlu0 %553
    %s556 = scalar_lea.vmem [#allocation15], 2
    %557 = vst.msk [vmem:[%s556] sm:$0x3] %vm156, %v554
    %559 = vrot.lane.b32.xlu0 %v545, 96
    %v560 = vpop.permute.xlu0 %559
    %s562 = scalar_lea.vmem [#allocation17], 2
    %563 = vst.msk [vmem:[%s562] sm:$0x3] %vm156, %v560
    %v564 = vld [vmem:[#allocation12] sm:$0xff]
    %v565 = vld [vmem:[#allocation12 + $0x8] sm:$0xff]
    %v566 = vld [vmem:[#allocation12 + $0x10] sm:$0xff]
    %v567 = vld [vmem:[#allocation12 + $0x18] sm:$0xff]
    %v568 = vld [vmem:[%s12] sm:$0x1]
    %v570 = vperm.slane %v568, 0
    %v572 = vsel %vm361, %v554, 0
    %574 = vmatpush.msra.mxu0 0.0
    %575 = vmatpush.msra.mxu0 0.0
    %576 = vmatpush.msra.mxu0 0.0
    %577 = vmatpush.msra.mxu0 0.0
    %578 = vmatpush.msra.mxu0 0.0
    %579 = vmatpush.msra.mxu0 0.0
    %580 = vmatpush.msra.mxu0 0.0
    %581 = vmatpush.msra.mxu0 0.0
    %582 = vmatpush.msra.mxu0 0.0
    %583 = vmatpush.msra.mxu0 0.0
    %584 = vmatpush.msra.mxu0 0.0
    %585 = vmatpush.msra.mxu0 0.0
    %586 = vmatpush.msra.mxu0 %v567
    %587 = vmatpush.msra.mxu0 %v566
    %588 = vmatpush.msra.mxu0 %v565
    %589 = vmatpush.msra.mxu0 %v564
    %590 = vmatmul.f32.gmra.mxu0 %v572
    %v591 = vpop.f32.mrf.mxu0
    %v592 = vadd.f32 %v570, %v591
    %593 = vdwg.mxu0
    %vm594 = vcmask 402432
    %595 = vst.msk [vmem:[#allocation14] sm:$0x3] %vm594, %v592
    // Predicated region
    $region78: #{decoder_forward.1} parent=1 // pred_check
      _
    $region79: #{decoder_forward.1} parent=1 // pred_check_branch
      %597 = sbr.rel (0) target = $region81
    $region80: #{decoder_forward.1} parent=1 // pred_region
      %599 = vsyncadd [#allocation5], 0
      %s601 = sshll.u32 [#allocation14], 4
      %s602 = int_to_ptr.vmem [resolvable:$true] %s601
      %s603 = sshll.u32 %s13, 4
      %s604 = int_to_ptr.hbm [resolvable:$true] %s603
      %606 = dma.vmem_to_hbm [thread:$0]  %s602, 32, %s604, [#allocation5]
    $region81: #{decoder_forward.1} parent=1 // pred_fallthru
      _
    // Predicated region
    $region82: #{decoder_forward.1} parent=1 // pred_check
      _
    $region83: #{decoder_forward.1} parent=1 // pred_check_branch
      %608 = sbr.rel (0) target = $region85
    $region84: #{decoder_forward.1} parent=1 // pred_region
      %610 = vsyncadd [#allocation16], 0
      %s611 = sshll.u32 [#allocation15], 4
      %s612 = int_to_ptr.vmem [resolvable:$true] %s611
      %s613 = sshll.u32 %s14, 4
      %s614 = int_to_ptr.hbm [resolvable:$true] %s613
      %619 = dma.vmem_to_hbm [thread:$0]  %s612, 64, %s614, [#allocation16], 32, 32, 2
    $region85: #{decoder_forward.1} parent=1 // pred_fallthru
      _
    // Predicated region
    $region86: #{decoder_forward.1} parent=1 // pred_check
      _
    $region87: #{decoder_forward.1} parent=1 // pred_check_branch
      %621 = sbr.rel (0) target = $region89
    $region88: #{decoder_forward.1} parent=1 // pred_region
      %623 = vsyncadd [#allocation16], 0
      %s624 = sshll.u32 [#allocation17], 4
      %s625 = int_to_ptr.vmem [resolvable:$true] %s624
      %s626 = sshll.u32 %s15, 4
      %s627 = int_to_ptr.hbm [resolvable:$true] %s626
      %632 = dma.vmem_to_hbm [thread:$0]  %s625, 64, %s627, [#allocation16], 32, 32, 2
    $region89: #{decoder_forward.1} parent=1 // pred_fallthru
      _
    // Predicated region
    $region90: #{decoder_forward.1} parent=1 // pred_check
      _
    $region91: #{decoder_forward.1} parent=1 // pred_check_branch
      %634 = sbr.rel (0) target = $region93
    $region92: #{decoder_forward.1} parent=1 // pred_region
      %636 = dma.done [#allocation5], 32
    $region93: #{decoder_forward.1} parent=1 // pred_fallthru
      _
    // Predicated region
    $region94: #{decoder_forward.1} parent=1 // pred_check
      _
    $region95: #{decoder_forward.1} parent=1 // pred_check_branch
      %638 = sbr.rel (0) target = $region97
    $region96: #{decoder_forward.1} parent=1 // pred_region
      %640 = dma.done [#allocation16], 64
    $region97: #{decoder_forward.1} parent=1 // pred_fallthru
      _
    // Predicated region
    $region98: #{decoder_forward.1} parent=1 // pred_check
      _
    $region99: #{decoder_forward.1} parent=1 // pred_check_branch
      %642 = sbr.rel (0) target = $region101
    $region100: #{decoder_forward.1} parent=1 // pred_region
      %644 = dma.done [#allocation16], 64
    $region101: #{decoder_forward.1} parent=1 // pred_fallthru
      _
    %645 = vsyncpa [#allocation4], 1
    %646 = vsyncpa [#allocation7], 1
    %647 = vsyncpa [#allocation10], 1
    %648 = vsyncpa [#allocation13], 1
    %649 = vsyncpa [#allocation5], 1
    %650 = vsyncpa [#allocation16], 1

</llo_original>
